<compile_context>
chip_gen: v7x
topology: tpu7x:2x2x1
jax: 0.10.0
libtpu: 0.0.40
codegen_flags: <defaults>
</compile_context>

<pallas_src>
import jax
import jax.numpy as jnp
from jax.experimental import pallas as pl
from jax.experimental.pallas import tpu as pltpu


def _round_up(n, m):
    return ((n + m - 1) // m) * m


def _make_qmix_critic_kernel(num_layers):
    """Fused MLP kernel: Linear(+ReLU) x (L-1), then final Linear (q-values)."""

    def kernel(x_ref, *refs):
        out_ref = refs[-1]
        param_refs = refs[:-1]  # w0, b0, w1, b1, ... (w_i bf16, b_i f32)
        acts = x_ref[...]       # bf16 activations (layer-0 input)
        for i in range(num_layers):
            w = param_refs[2 * i][...]      # bf16 weight (in_pad, out_pad)
            b = param_refs[2 * i + 1][...]  # f32 bias   (1, out_pad)
            lhs = acts if acts.dtype == jnp.bfloat16 else acts.astype(jnp.bfloat16)
            # bf16 MXU matmul, f32 accumulation; bias add / ReLU stay in f32.
            acts = jnp.dot(lhs, w, preferred_element_type=jnp.float32) + b
            if i < num_layers - 1:
                acts = jnp.maximum(acts, 0.0)  # nn.ReLU between hidden layers
        out_ref[...] = acts.astype(out_ref.dtype)

    return kernel


def prepare_qmix_params(params):
    """One-time param preparation (do NOT call per forward step).

    Casts weights to bf16 and zero-pads hidden layers to 128-lane widths:
      * hidden out-dims -> multiple of 128 (lane-dense VPU ops in the kernel),
      * each layer's in-dim -> the (padded) width of the incoming activations.
    Zero padding keeps the math exact. The final layer's out-dim is left
    unpadded so the output store is (B, d_out) with no wasted HBM bytes.
    """
    num_layers = len(params)
    flat, dims = [], []
    prev_out_pad = None
    for li, (w, b) in enumerate(params):
        d_in, d_out = w.shape
        dims.append((d_in, d_out))
        is_last = li == num_layers - 1
        in_pad = d_in if li == 0 else prev_out_pad
        out_pad = d_out if is_last else _round_up(d_out, 128)
        w_p = jnp.zeros((in_pad, out_pad), jnp.bfloat16)
        w_p = w_p.at[:d_in, :d_out].set(w.astype(jnp.bfloat16))
        b_p = jnp.zeros((1, out_pad), jnp.float32)
        b_p = b_p.at[:, :d_out].set(jnp.reshape(b, (1, d_out)).astype(jnp.float32))
        flat.extend([w_p, b_p])
        prev_out_pad = out_pad
    return {
        "flat": flat,
        "dims": dims,
        "num_layers": num_layers,
        "d_in": dims[0][0],
        "d_out": dims[-1][1],
    }


def qmix_critic_forward(x, prepared, *, batch_tile=2048):
    """QMIX_Critic forward (hidden_state=None path).

    Args:
      x:        (B, D0) float32 (or bf16) activations.
      prepared: output of prepare_qmix_params(params).
      batch_tile: max rows per grid step.

    Returns:
      (q_values (B, D_out) f32, None) — mirrors the PyTorch return signature.
    """
    B = x.shape[0]
    d_in = prepared["d_in"]
    d_out = prepared["d_out"]
    num_layers = prepared["num_layers"]
    flat = prepared["flat"]

    # Tile: big (amortize ~0.35us/step, dense DMAs on v5e/v6e) but capped at
    # ceil(B/2) so the parallel grid has >= 2 steps and both v7x TCs engage.
    tile = min(batch_tile, max(8, _round_up(pl.cdiv(B, 2), 8)))
    grid = pl.cdiv(B, tile)  # partial last block handled by Pallas (rows independent)

    # bf16 input halves the input DMA; the kernel truncates to bf16 before the
    # MXU anyway, so there is no additional precision loss.
    x_bf = x.astype(jnp.bfloat16)

    in_specs = [pl.BlockSpec((tile, d_in), lambda i: (i, 0))]
    for p in flat:
        # Tiny params (~40 KB total): full arrays, constant index_map -> block
        # revisited across grid steps, effectively VMEM-resident.
        in_specs.append(pl.BlockSpec(p.shape, lambda i: (0, 0)))
    out_spec = pl.BlockSpec((tile, d_out), lambda i: (i, 0))

    flops = 2 * B * sum(di * do for di, do in prepared["dims"])
    bytes_accessed = (
        B * d_in * 2                      # bf16 input
        + B * d_out * 4                   # f32 output
        + sum(int(p.size) * p.dtype.itemsize for p in flat)
    )

    q_values = pl.pallas_call(
        _make_qmix_critic_kernel(num_layers),
        out_shape=jax.ShapeDtypeStruct((B, d_out), jnp.float32),
        grid=(grid,),
        in_specs=in_specs,
        out_specs=out_spec,
        compiler_params=pltpu.CompilerParams(
            dimension_semantics=("parallel",),
        ),
        cost_estimate=pl.CostEstimate(
            flops=flops, transcendentals=0, bytes_accessed=bytes_accessed,
        ),
    )(x_bf, *flat)

    return q_values, None  # new_hidden_state is None on this path


def init_linear_params(key, fc_layers):
    """Deterministic init mimicking PyTorch nn.Linear default U[-1/sqrt(in), 1/sqrt(in)]."""
    params = []
    for in_dim, out_dim in zip(fc_layers, fc_layers[1:]):
        key, kw, kb = jax.random.split(key, 3)
        bound = 1.0 / jnp.sqrt(jnp.float32(in_dim))
        w = jax.random.uniform(kw, (in_dim, out_dim), jnp.float32, -bound, bound)
        b = jax.random.uniform(kb, (1, out_dim), jnp.float32, -bound, bound)
        params.append((w, b))
    return params


def reference_forward(x, params):
    """Pure-JAX reference of the PyTorch forward (hidden_state=None), using the
    same bf16-inputs / f32-accumulation matmul math as the kernel."""
    acts = x
    for i, (w, b) in enumerate(params):
        acts = jnp.dot(acts.astype(jnp.bfloat16), w.astype(jnp.bfloat16),
                       preferred_element_type=jnp.float32) + b
        if i < len(params) - 1:
            acts = jnp.maximum(acts, 0.0)
    return acts


if __name__ == "__main__":
    # Module config (shapes implied by __init__):
    #   before_rnn_layers = [40, 64], after_rnn_layers = [64, 32, 8]
    #   -> fc_layers = [40, 64, 64, 32, 8] -> 4 Linear layers.
    before_rnn_layers = [40, 64]
    after_rnn_layers = [64, 32, 8]
    fc_layers = before_rnn_layers + after_rnn_layers

    key = jax.random.PRNGKey(0)
    key, kx = jax.random.split(key)
    batch = 16
    x = jax.random.normal(kx, (batch, fc_layers[0]), dtype=jnp.float32)

    params = init_linear_params(key, fc_layers)
    prepared = prepare_qmix_params(params)   # one-time bf16 cast + layout pad

    # batch=16 -> tile=8, grid=2 (exercises multi-step parallel grid).
    q_values, new_hidden_state = qmix_critic_forward(x, prepared)
    q_values = jax.block_until_ready(q_values)

    q_ref = reference_forward(x, params)
    assert q_values.shape == (batch, fc_layers[-1])
    assert new_hidden_state is None
    assert jnp.allclose(q_values, q_ref, atol=1e-2, rtol=1e-2)

    # Non-tile-divisible batch: grid=3 with a partial last block (no batch pad).
    key, kx2 = jax.random.split(key)
    batch2 = 40
    x2 = jax.random.normal(kx2, (batch2, fc_layers[0]), dtype=jnp.float32)
    q2, _ = qmix_critic_forward(x2, prepared, batch_tile=16)
    q2 = jax.block_until_ready(q2)
    q2_ref = reference_forward(x2, params)
    assert q2.shape == (batch2, fc_layers[-1])
    assert jnp.allclose(q2, q2_ref, atol=1e-2, rtol=1e-2)

    # Tiny batch smaller than one sublane tile (block > array, grid=1).
    key, kx3 = jax.random.split(key)
    batch3 = 3
    x3 = jax.random.normal(kx3, (batch3, fc_layers[0]), dtype=jnp.float32)
    q3, _ = qmix_critic_forward(x3, prepared)
    q3 = jax.block_until_ready(q3)
    q3_ref = reference_forward(x3, params)
    assert q3.shape == (batch3, fc_layers[-1])
    assert jnp.allclose(q3, q3_ref, atol=1e-2, rtol=1e-2)

    print("KERNEL_OK")
</pallas_src>

<mosaic_0001>
module attributes {stable_mosaic.version = 11 : i64} {
  func.func @kernel(%arg0: i32, %arg1: memref<8x40xbf16, #tpu.memory_space<vmem>>, %arg2: memref<40x128xbf16, #tpu.memory_space<vmem>>, %arg3: memref<1x128xf32, #tpu.memory_space<vmem>>, %arg4: memref<128x128xbf16, #tpu.memory_space<vmem>>, %arg5: memref<1x128xf32, #tpu.memory_space<vmem>>, %arg6: memref<128x128xbf16, #tpu.memory_space<vmem>>, %arg7: memref<1x128xf32, #tpu.memory_space<vmem>>, %arg8: memref<128x8xbf16, #tpu.memory_space<vmem>>, %arg9: memref<1x8xf32, #tpu.memory_space<vmem>>, %arg10: memref<8x8xf32, #tpu.memory_space<vmem>>) attributes {dimension_semantics = [#tpu.dimension_semantics<parallel>], iteration_bounds = array<i64: 2>, scalar_prefetch = 0 : i64, scratch_operands = 0 : i64, tpu.core_type = #tpu.core_type<tc>, window_params = [{transform_indices = @transform_0, window_bounds = array<i64: 8, 40>}, {pipeline_mode = #tpu.pipeline_mode<synchronous>, transform_indices = @transform_1, window_bounds = array<i64: 40, 128>}, {pipeline_mode = #tpu.pipeline_mode<synchronous>, transform_indices = @transform_2, window_bounds = array<i64: 1, 128>}, {pipeline_mode = #tpu.pipeline_mode<synchronous>, transform_indices = @transform_3, window_bounds = array<i64: 128, 128>}, {pipeline_mode = #tpu.pipeline_mode<synchronous>, transform_indices = @transform_4, window_bounds = array<i64: 1, 128>}, {pipeline_mode = #tpu.pipeline_mode<synchronous>, transform_indices = @transform_5, window_bounds = array<i64: 128, 128>}, {pipeline_mode = #tpu.pipeline_mode<synchronous>, transform_indices = @transform_6, window_bounds = array<i64: 1, 128>}, {pipeline_mode = #tpu.pipeline_mode<synchronous>, transform_indices = @transform_7, window_bounds = array<i64: 128, 8>}, {pipeline_mode = #tpu.pipeline_mode<synchronous>, transform_indices = @transform_8, window_bounds = array<i64: 1, 8>}, {transform_indices = @transform_9, window_bounds = array<i64: 8, 8>}]} {
    %c0 = arith.constant 0 : index
    %c0_0 = arith.constant 0 : index
    %0 = vector.load %arg1[%c0, %c0_0] : memref<8x40xbf16, #tpu.memory_space<vmem>>, vector<8x40xbf16>
    %c0_1 = arith.constant 0 : index
    %c0_2 = arith.constant 0 : index
    %1 = vector.load %arg2[%c0_1, %c0_2] : memref<40x128xbf16, #tpu.memory_space<vmem>>, vector<40x128xbf16>
    %c0_3 = arith.constant 0 : index
    %c0_4 = arith.constant 0 : index
    %2 = vector.load %arg3[%c0_3, %c0_4] : memref<1x128xf32, #tpu.memory_space<vmem>>, vector<1x128xf32>
    %cst = arith.constant dense<0.000000e+00> : vector<8x128xf32>
    %3 = tpu.matmul %0, %1, %cst {dimension_numbers = #tpu.dot_dimension_numbers<[1], [0], [0], [1], [0, 0, 1, 1], [], []>} : vector<8x40xbf16>, vector<40x128xbf16>, vector<8x128xf32> -> vector<8x128xf32>
    %4 = vector.broadcast %2 : vector<1x128xf32> to vector<8x128xf32>
    %5 = arith.addf %3, %4 : vector<8x128xf32>
    %cst_5 = arith.constant 0.000000e+00 : f32
    %6 = vector.broadcast %cst_5 : f32 to vector<8x128xf32>
    %7 = arith.maximumf %5, %6 : vector<8x128xf32>
    %c0_6 = arith.constant 0 : index
    %c0_7 = arith.constant 0 : index
    %8 = vector.load %arg4[%c0_6, %c0_7] : memref<128x128xbf16, #tpu.memory_space<vmem>>, vector<128x128xbf16>
    %c0_8 = arith.constant 0 : index
    %c0_9 = arith.constant 0 : index
    %9 = vector.load %arg5[%c0_8, %c0_9] : memref<1x128xf32, #tpu.memory_space<vmem>>, vector<1x128xf32>
    %10 = arith.truncf %7 : vector<8x128xf32> to vector<8x128xbf16>
    %cst_10 = arith.constant dense<0.000000e+00> : vector<8x128xf32>
    %11 = tpu.matmul %10, %8, %cst_10 {dimension_numbers = #tpu.dot_dimension_numbers<[1], [0], [0], [1], [0, 0, 1, 1], [], []>} : vector<8x128xbf16>, vector<128x128xbf16>, vector<8x128xf32> -> vector<8x128xf32>
    %12 = vector.broadcast %9 : vector<1x128xf32> to vector<8x128xf32>
    %13 = arith.addf %11, %12 : vector<8x128xf32>
    %cst_11 = arith.constant 0.000000e+00 : f32
    %14 = vector.broadcast %cst_11 : f32 to vector<8x128xf32>
    %15 = arith.maximumf %13, %14 : vector<8x128xf32>
    %c0_12 = arith.constant 0 : index
    %c0_13 = arith.constant 0 : index
    %16 = vector.load %arg6[%c0_12, %c0_13] : memref<128x128xbf16, #tpu.memory_space<vmem>>, vector<128x128xbf16>
    %c0_14 = arith.constant 0 : index
    %c0_15 = arith.constant 0 : index
    %17 = vector.load %arg7[%c0_14, %c0_15] : memref<1x128xf32, #tpu.memory_space<vmem>>, vector<1x128xf32>
    %18 = arith.truncf %15 : vector<8x128xf32> to vector<8x128xbf16>
    %cst_16 = arith.constant dense<0.000000e+00> : vector<8x128xf32>
    %19 = tpu.matmul %18, %16, %cst_16 {dimension_numbers = #tpu.dot_dimension_numbers<[1], [0], [0], [1], [0, 0, 1, 1], [], []>} : vector<8x128xbf16>, vector<128x128xbf16>, vector<8x128xf32> -> vector<8x128xf32>
    %20 = vector.broadcast %17 : vector<1x128xf32> to vector<8x128xf32>
    %21 = arith.addf %19, %20 : vector<8x128xf32>
    %cst_17 = arith.constant 0.000000e+00 : f32
    %22 = vector.broadcast %cst_17 : f32 to vector<8x128xf32>
    %23 = arith.maximumf %21, %22 : vector<8x128xf32>
    %c0_18 = arith.constant 0 : index
    %c0_19 = arith.constant 0 : index
    %24 = vector.load %arg8[%c0_18, %c0_19] : memref<128x8xbf16, #tpu.memory_space<vmem>>, vector<128x8xbf16>
    %c0_20 = arith.constant 0 : index
    %c0_21 = arith.constant 0 : index
    %25 = vector.load %arg9[%c0_20, %c0_21] : memref<1x8xf32, #tpu.memory_space<vmem>>, vector<1x8xf32>
    %26 = arith.truncf %23 : vector<8x128xf32> to vector<8x128xbf16>
    %cst_22 = arith.constant dense<0.000000e+00> : vector<8x8xf32>
    %27 = tpu.matmul %26, %24, %cst_22 {dimension_numbers = #tpu.dot_dimension_numbers<[1], [0], [0], [1], [0, 0, 1, 1], [], []>} : vector<8x128xbf16>, vector<128x8xbf16>, vector<8x8xf32> -> vector<8x8xf32>
    %28 = vector.broadcast %25 : vector<1x8xf32> to vector<8x8xf32>
    %29 = arith.addf %27, %28 : vector<8x8xf32>
    %c0_23 = arith.constant 0 : index
    %c0_24 = arith.constant 0 : index
    %30 = vector.load %arg10[%c0_23, %c0_24] : memref<8x8xf32, #tpu.memory_space<vmem>>, vector<8x8xf32>
    tpu.vector_store %arg10[%c0_23, %c0_24], %29 {strides = array<i32>} : memref<8x8xf32, #tpu.memory_space<vmem>>, vector<8x8xf32>,
    return
  }
  func.func @transform_0(%arg0: i32) -> (i32, i32) {
    %c0_i32 = arith.constant 0 : i32
    %c0_i32_0 = arith.constant 0 : i32
    return %arg0, %c0_i32 : i32, i32
  }
  func.func @transform_1(%arg0: i32) -> (i32, i32) {
    %c0_i32 = arith.constant 0 : i32
    %c0_i32_0 = arith.constant 0 : i32
    %c0_i32_1 = arith.constant 0 : i32
    return %c0_i32, %c0_i32_0 : i32, i32
  }
  func.func @transform_2(%arg0: i32) -> (i32, i32) {
    %c0_i32 = arith.constant 0 : i32
    %c0_i32_0 = arith.constant 0 : i32
    %c0_i32_1 = arith.constant 0 : i32
    return %c0_i32, %c0_i32_0 : i32, i32
  }
  func.func @transform_3(%arg0: i32) -> (i32, i32) {
    %c0_i32 = arith.constant 0 : i32
    %c0_i32_0 = arith.constant 0 : i32
    %c0_i32_1 = arith.constant 0 : i32
    return %c0_i32, %c0_i32_0 : i32, i32
  }
  func.func @transform_4(%arg0: i32) -> (i32, i32) {
    %c0_i32 = arith.constant 0 : i32
    %c0_i32_0 = arith.constant 0 : i32
    %c0_i32_1 = arith.constant 0 : i32
    return %c0_i32, %c0_i32_0 : i32, i32
  }
  func.func @transform_5(%arg0: i32) -> (i32, i32) {
    %c0_i32 = arith.constant 0 : i32
    %c0_i32_0 = arith.constant 0 : i32
    %c0_i32_1 = arith.constant 0 : i32
    return %c0_i32, %c0_i32_0 : i32, i32
  }
  func.func @transform_6(%arg0: i32) -> (i32, i32) {
    %c0_i32 = arith.constant 0 : i32
    %c0_i32_0 = arith.constant 0 : i32
    %c0_i32_1 = arith.constant 0 : i32
    return %c0_i32, %c0_i32_0 : i32, i32
  }
  func.func @transform_7(%arg0: i32) -> (i32, i32) {
    %c0_i32 = arith.constant 0 : i32
    %c0_i32_0 = arith.constant 0 : i32
    %c0_i32_1 = arith.constant 0 : i32
    return %c0_i32, %c0_i32_0 : i32, i32
  }
  func.func @transform_8(%arg0: i32) -> (i32, i32) {
    %c0_i32 = arith.constant 0 : i32
    %c0_i32_0 = arith.constant 0 : i32
    %c0_i32_1 = arith.constant 0 : i32
    return %c0_i32, %c0_i32_0 : i32, i32
  }
  func.func @transform_9(%arg0: i32) -> (i32, i32) {
    %c0_i32 = arith.constant 0 : i32
    %c0_i32_0 = arith.constant 0 : i32
    return %arg0, %c0_i32 : i32, i32
  }
}

</mosaic_0001>

<llo_original>
// kernel: tpu_custom_call.1
$region0: #{tpu_custom_call.1}
  #allocation0 [shape = 'u32[]', space=smem, size = 0x4, offset = 0x4, fixed_abs, tag = 'smem constant byte address 0x4 - core index']
  #allocation1 [shape = 'u32[144,128]{1,0:T(1,128)}', space=vmem, size = 0x12000, scoped, tag = 'internal scratch']
  %s0 = inlined_call_operand.vmem [shape: bf16[16,40], index: 0, kind: input, shape index: {}]
  %s1 = inlined_call_operand.hbm [shape: bf16[40,128], index: 1, kind: input, shape index: {}]
  %s2 = inlined_call_operand.vmem [shape: f32[1,128], index: 2, kind: input, shape index: {}]
  %s3 = inlined_call_operand.vmem [shape: bf16[128,128], index: 3, kind: input, shape index: {}]
  %s4 = inlined_call_operand.vmem [shape: f32[1,128], index: 4, kind: input, shape index: {}]
  %s5 = inlined_call_operand.hbm [shape: bf16[128,128], index: 5, kind: input, shape index: {}]
  %s6 = inlined_call_operand.vmem [shape: f32[1,128], index: 6, kind: input, shape index: {}]
  %s7 = inlined_call_operand.vmem [shape: bf16[128,8], index: 7, kind: input, shape index: {}]
  %s8 = inlined_call_operand.vmem [shape: f32[1,8], index: 8, kind: input, shape index: {}]
  %s9 = inlined_call_operand.vmem [shape: f32[16,8], index: 9, kind: output, shape index: {}]
  %s10 = sld [smem:[#allocation0]]
  $region77: #{tpu_custom_call.1} parent=0
    _
  %s12 = ssub.s32 1, %s10
  %s13 = scalar_select 0, %s12, %s10
  $region1: #{tpu_custom_call.1} parent=0
    #allocation2 [shape = 'u8[10240]{0}', space=vmem, size = 0x2800, scoped, tag = 'input window, operand 1, single buffered']
    #allocation3 [shape = 's32[2]{0}', space=sflag, size = 0x8, scoped, tag = 'scoped memory for tpu_custom_call.1']
    #allocation4 [shape = 'u8[32768]{0}', space=vmem, size = 0x8000, scoped, tag = 'input window, operand 5, single buffered']
    #allocation5 [shape = 's32[1]{0}', space=sflag, size = 0x4, scoped, tag = 'scoped memory for tpu_custom_call.1']
    %14 = vsyncpa [#allocation3], 0
    %15 = vsyncpa [#allocation5], 0
    loop: start=0, step=1, limit=4
    $region2: #{tpu_custom_call.1} parent=1 // loop_pre_header
      _
    $region3: #{tpu_custom_call.1} parent=1 // loop_header
      %s17 = sphi 0, %s21
      %p18 = scmp.ge.s32.totalorder %s17, 4
      %s27 = sphi 0, %s29
      %s30 = sphi 0, %s27
      %s31 = sphi 0, %s30
      %s47 = sphi 0, %s31
      %s51 = sphi 0, %s51
      %s53 = sphi 0, %s51
      %s54 = sphi 0, %s53
      %s68 = sphi 0, %s54
      %s72 = sphi 0, %s72
      %s74 = sphi 0, %s72
      %s75 = sphi 0, %s74
      %s89 = sphi 0, %s75
      %s93 = sphi 0, %s93
      %s95 = sphi 0, %s93
      %s96 = sphi 0, %s95
      %s110 = sphi 0, %s96
      %s114 = sphi 0, %s114
      %s116 = sphi 0, %s114
      %s117 = sphi 0, %s116
      %s131 = sphi 0, %s117
      %s135 = sphi 0, %s135
      %s137 = sphi 0, %s135
      %s138 = sphi 0, %s137
      %s152 = sphi 0, %s138
      %s156 = sphi 0, %s156
      %s158 = sphi 0, %s156
      %s159 = sphi 0, %s158
      %s173 = sphi 0, %s159
      %s177 = sphi 0, %s177
      %s179 = sphi 0, %s177
      %s180 = sphi 0, %s179
      %s194 = sphi 0, %s180
      %s198 = sphi 0, %s198
      %s200 = sphi 0, %s198
      %s201 = sphi 0, %s200
      %s215 = sphi 0, %s201
      %s221 = sphi 0, %s223
      %s224 = sphi 0, %s221
      %s225 = sphi 0, %s224
      %s241 = sphi 0, %s225
    $region4: #{tpu_custom_call.1} parent=1 // loop_header_branch
      %20 = sbr.rel (%p18) target = $region8
    $region5: #{tpu_custom_call.1} parent=1 // loop_body
      %s22 = ssub.s32 %s17, 1
      %s23 = ssub.s32 %s17, 2
      %s24 = sadd.s32 %s17, 1
      %s25 = ssub.s32 %s17, %s24
      %p26 = scmp.eq.s32.totalorder %s25, 0
      %s28 = sadd.s32 %s27, 1
      %s29 = scalar_select %p26, %s27, %s28
      %p32 = pneg %p26
      %p33 = scmp.eq.s32.totalorder %s17, 1
      %p34 = por %p32, %p33
      %p35 = scmp.ne.s32.totalorder %s27, %s30
      %p36 = scmp.eq.s32.totalorder %s17, 0
      %p37 = por %p35, %p36
      %p38 = scmp.ne.s32.totalorder %s27, %s30
      %p39 = scmp.eq.s32.totalorder %s22, 1
      %p40 = por %p38, %p39
      %p41 = scmp.ne.s32.totalorder %s30, %s31
      %p42 = scmp.eq.s32.totalorder %s22, 0
      %p43 = por %p41, %p42
      %p44 = scmp.ne.s32.totalorder %s30, %s31
      %p45 = scmp.eq.s32.totalorder %s23, 1
      %p46 = por %p44, %p45
      %p48 = scmp.ne.s32.totalorder %s31, %s47
      %p49 = scmp.eq.s32.totalorder %s23, 0
      %p50 = por %p48, %p49
      %s52 = sadd.s32 %s51, 1
      %p55 = scmp.eq.s32.totalorder %s17, 1
      %p56 = scmp.ne.s32.totalorder %s51, %s53
      %p57 = scmp.eq.s32.totalorder %s17, 0
      %p58 = por %p56, %p57
      %p59 = scmp.ne.s32.totalorder %s51, %s53
      %p60 = scmp.eq.s32.totalorder %s22, 1
      %p61 = por %p59, %p60
      %p62 = scmp.ne.s32.totalorder %s53, %s54
      %p63 = scmp.eq.s32.totalorder %s22, 0
      %p64 = por %p62, %p63
      %p65 = scmp.ne.s32.totalorder %s53, %s54
      %p66 = scmp.eq.s32.totalorder %s23, 1
      %p67 = por %p65, %p66
      %p69 = scmp.ne.s32.totalorder %s54, %s68
      %p70 = scmp.eq.s32.totalorder %s23, 0
      %p71 = por %p69, %p70
      %s73 = sadd.s32 %s72, 1
      %p76 = scmp.eq.s32.totalorder %s17, 1
      %p77 = scmp.ne.s32.totalorder %s72, %s74
      %p78 = scmp.eq.s32.totalorder %s17, 0
      %p79 = por %p77, %p78
      %p80 = scmp.ne.s32.totalorder %s72, %s74
      %p81 = scmp.eq.s32.totalorder %s22, 1
      %p82 = por %p80, %p81
      %p83 = scmp.ne.s32.totalorder %s74, %s75
      %p84 = scmp.eq.s32.totalorder %s22, 0
      %p85 = por %p83, %p84
      %p86 = scmp.ne.s32.totalorder %s74, %s75
      %p87 = scmp.eq.s32.totalorder %s23, 1
      %p88 = por %p86, %p87
      %p90 = scmp.ne.s32.totalorder %s75, %s89
      %p91 = scmp.eq.s32.totalorder %s23, 0
      %p92 = por %p90, %p91
      %s94 = sadd.s32 %s93, 1
      %p97 = scmp.eq.s32.totalorder %s17, 1
      %p98 = scmp.ne.s32.totalorder %s93, %s95
      %p99 = scmp.eq.s32.totalorder %s17, 0
      %p100 = por %p98, %p99
      %p101 = scmp.ne.s32.totalorder %s93, %s95
      %p102 = scmp.eq.s32.totalorder %s22, 1
      %p103 = por %p101, %p102
      %p104 = scmp.ne.s32.totalorder %s95, %s96
      %p105 = scmp.eq.s32.totalorder %s22, 0
      %p106 = por %p104, %p105
      %p107 = scmp.ne.s32.totalorder %s95, %s96
      %p108 = scmp.eq.s32.totalorder %s23, 1
      %p109 = por %p107, %p108
      %p111 = scmp.ne.s32.totalorder %s96, %s110
      %p112 = scmp.eq.s32.totalorder %s23, 0
      %p113 = por %p111, %p112
      %s115 = sadd.s32 %s114, 1
      %p118 = scmp.eq.s32.totalorder %s17, 1
      %p119 = scmp.ne.s32.totalorder %s114, %s116
      %p120 = scmp.eq.s32.totalorder %s17, 0
      %p121 = por %p119, %p120
      %p122 = scmp.ne.s32.totalorder %s114, %s116
      %p123 = scmp.eq.s32.totalorder %s22, 1
      %p124 = por %p122, %p123
      %p125 = scmp.ne.s32.totalorder %s116, %s117
      %p126 = scmp.eq.s32.totalorder %s22, 0
      %p127 = por %p125, %p126
      %p128 = scmp.ne.s32.totalorder %s116, %s117
      %p129 = scmp.eq.s32.totalorder %s23, 1
      %p130 = por %p128, %p129
      %p132 = scmp.ne.s32.totalorder %s117, %s131
      %p133 = scmp.eq.s32.totalorder %s23, 0
      %p134 = por %p132, %p133
      %s136 = sadd.s32 %s135, 1
      %p139 = scmp.eq.s32.totalorder %s17, 1
      %p140 = scmp.ne.s32.totalorder %s135, %s137
      %p141 = scmp.eq.s32.totalorder %s17, 0
      %p142 = por %p140, %p141
      %p143 = scmp.ne.s32.totalorder %s135, %s137
      %p144 = scmp.eq.s32.totalorder %s22, 1
      %p145 = por %p143, %p144
      %p146 = scmp.ne.s32.totalorder %s137, %s138
      %p147 = scmp.eq.s32.totalorder %s22, 0
      %p148 = por %p146, %p147
      %p149 = scmp.ne.s32.totalorder %s137, %s138
      %p150 = scmp.eq.s32.totalorder %s23, 1
      %p151 = por %p149, %p150
      %p153 = scmp.ne.s32.totalorder %s138, %s152
      %p154 = scmp.eq.s32.totalorder %s23, 0
      %p155 = por %p153, %p154
      %s157 = sadd.s32 %s156, 1
      %p160 = scmp.eq.s32.totalorder %s17, 1
      %p161 = scmp.ne.s32.totalorder %s156, %s158
      %p162 = scmp.eq.s32.totalorder %s17, 0
      %p163 = por %p161, %p162
      %p164 = scmp.ne.s32.totalorder %s156, %s158
      %p165 = scmp.eq.s32.totalorder %s22, 1
      %p166 = por %p164, %p165
      %p167 = scmp.ne.s32.totalorder %s158, %s159
      %p168 = scmp.eq.s32.totalorder %s22, 0
      %p169 = por %p167, %p168
      %p170 = scmp.ne.s32.totalorder %s158, %s159
      %p171 = scmp.eq.s32.totalorder %s23, 1
      %p172 = por %p170, %p171
      %p174 = scmp.ne.s32.totalorder %s159, %s173
      %p175 = scmp.eq.s32.totalorder %s23, 0
      %p176 = por %p174, %p175
      %s178 = sadd.s32 %s177, 1
      %p181 = scmp.eq.s32.totalorder %s17, 1
      %p182 = scmp.ne.s32.totalorder %s177, %s179
      %p183 = scmp.eq.s32.totalorder %s17, 0
      %p184 = por %p182, %p183
      %p185 = scmp.ne.s32.totalorder %s177, %s179
      %p186 = scmp.eq.s32.totalorder %s22, 1
      %p187 = por %p185, %p186
      %p188 = scmp.ne.s32.totalorder %s179, %s180
      %p189 = scmp.eq.s32.totalorder %s22, 0
      %p190 = por %p188, %p189
      %p191 = scmp.ne.s32.totalorder %s179, %s180
      %p192 = scmp.eq.s32.totalorder %s23, 1
      %p193 = por %p191, %p192
      %p195 = scmp.ne.s32.totalorder %s180, %s194
      %p196 = scmp.eq.s32.totalorder %s23, 0
      %p197 = por %p195, %p196
      %s199 = sadd.s32 %s198, 1
      %p202 = scmp.eq.s32.totalorder %s17, 1
      %p203 = scmp.ne.s32.totalorder %s198, %s200
      %p204 = scmp.eq.s32.totalorder %s17, 0
      %p205 = por %p203, %p204
      %p206 = scmp.ne.s32.totalorder %s198, %s200
      %p207 = scmp.eq.s32.totalorder %s22, 1
      %p208 = por %p206, %p207
      %p209 = scmp.ne.s32.totalorder %s200, %s201
      %p210 = scmp.eq.s32.totalorder %s22, 0
      %p211 = por %p209, %p210
      %p212 = scmp.ne.s32.totalorder %s200, %s201
      %p213 = scmp.eq.s32.totalorder %s23, 1
      %p214 = por %p212, %p213
      %p216 = scmp.ne.s32.totalorder %s201, %s215
      %p217 = scmp.eq.s32.totalorder %s23, 0
      %p218 = por %p216, %p217
      %s219 = ssub.s32 %s17, %s24
      %p220 = scmp.eq.s32.totalorder %s219, 0
      %s222 = sadd.s32 %s221, 1
      %s223 = scalar_select %p220, %s221, %s222
      %p226 = pneg %p220
      %p227 = scmp.eq.s32.totalorder %s17, 1
      %p228 = por %p226, %p227
      %p229 = scmp.ne.s32.totalorder %s221, %s224
      %p230 = scmp.eq.s32.totalorder %s17, 0
      %p231 = por %p229, %p230
      %p232 = scmp.ne.s32.totalorder %s221, %s224
      %p233 = scmp.eq.s32.totalorder %s22, 1
      %p234 = por %p232, %p233
      %p235 = scmp.ne.s32.totalorder %s224, %s225
      %p236 = scmp.eq.s32.totalorder %s22, 0
      %p237 = por %p235, %p236
      %p238 = scmp.ne.s32.totalorder %s224, %s225
      %p239 = scmp.eq.s32.totalorder %s23, 1
      %p240 = por %p238, %p239
      %p242 = scmp.ne.s32.totalorder %s225, %s241
      %p243 = scmp.eq.s32.totalorder %s23, 0
      %p244 = por %p242, %p243
      %p245 = scmp.le.s32.totalorder 1, %s17
      %p246 = scmp.lt.s32.totalorder %s17, 3
      %p247 = pnand %p245, %p246
      %p248 = pneg %p247
      // Predicated region
      $region9: #{tpu_custom_call.1} parent=5 // pred_check
        _
      $region10: #{tpu_custom_call.1} parent=5 // pred_check_branch
        %250 = sbr.rel (%p247) target = $region12
      $region11: #{tpu_custom_call.1} parent=5 // pred_region
        %s251 = ssub.s32 %s17, 1
        // Predicated region
        $region13: #{tpu_custom_call.1} parent=11 // pred_check
          %p252 = pneg %p64
        $region14: #{tpu_custom_call.1} parent=11 // pred_check_branch
          %254 = sbr.rel (%p252) target = $region16
        $region15: #{tpu_custom_call.1} parent=11 // pred_region
          %s256 = ssub.s32 320, 320
          %257 = vsyncadd [#allocation3], %s256
          %s258 = sshll.u32 [#allocation2], 4
          %s259 = int_to_ptr.vmem [resolvable:$true] %s258
          %264 = dma.hbm_to_vmem [thread:$0]  %s1, 320, %s259, [#allocation3], 64, 64, 4
        $region16: #{tpu_custom_call.1} parent=11 // pred_fallthru
          _
        // Predicated region
        $region17: #{tpu_custom_call.1} parent=11 // pred_check
          %p265 = pneg %p85
        $region18: #{tpu_custom_call.1} parent=11 // pred_check_branch
          %267 = sbr.rel (%p265) target = $region20
        $region19: #{tpu_custom_call.1} parent=11 // pred_region
          _
        $region20: #{tpu_custom_call.1} parent=11 // pred_fallthru
          _
        // Predicated region
        $region21: #{tpu_custom_call.1} parent=11 // pred_check
          %p268 = pneg %p106
        $region22: #{tpu_custom_call.1} parent=11 // pred_check_branch
          %270 = sbr.rel (%p268) target = $region24
        $region23: #{tpu_custom_call.1} parent=11 // pred_region
          _
        $region24: #{tpu_custom_call.1} parent=11 // pred_fallthru
          _
        // Predicated region
        $region25: #{tpu_custom_call.1} parent=11 // pred_check
          %p271 = pneg %p127
        $region26: #{tpu_custom_call.1} parent=11 // pred_check_branch
          %273 = sbr.rel (%p271) target = $region28
        $region27: #{tpu_custom_call.1} parent=11 // pred_region
          _
        $region28: #{tpu_custom_call.1} parent=11 // pred_fallthru
          _
        // Predicated region
        $region29: #{tpu_custom_call.1} parent=11 // pred_check
          %p274 = pneg %p148
        $region30: #{tpu_custom_call.1} parent=11 // pred_check_branch
          %276 = sbr.rel (%p274) target = $region32
        $region31: #{tpu_custom_call.1} parent=11 // pred_region
          %s278 = ssub.s32 1024, 1024
          %279 = vsyncadd [#allocation5], %s278
          %s280 = sshll.u32 [#allocation4], 4
          %s281 = int_to_ptr.vmem [resolvable:$true] %s280
          %286 = dma.hbm_to_vmem [thread:$0]  %s5, 1024, %s281, [#allocation5], 64, 64, 4
        $region32: #{tpu_custom_call.1} parent=11 // pred_fallthru
          _
        // Predicated region
        $region33: #{tpu_custom_call.1} parent=11 // pred_check
          %p287 = pneg %p169
        $region34: #{tpu_custom_call.1} parent=11 // pred_check_branch
          %289 = sbr.rel (%p287) target = $region36
        $region35: #{tpu_custom_call.1} parent=11 // pred_region
          _
        $region36: #{tpu_custom_call.1} parent=11 // pred_fallthru
          _
        // Predicated region
        $region37: #{tpu_custom_call.1} parent=11 // pred_check
          %p290 = pneg %p190
        $region38: #{tpu_custom_call.1} parent=11 // pred_check_branch
          %292 = sbr.rel (%p290) target = $region40
        $region39: #{tpu_custom_call.1} parent=11 // pred_region
          _
        $region40: #{tpu_custom_call.1} parent=11 // pred_fallthru
          _
        // Predicated region
        $region41: #{tpu_custom_call.1} parent=11 // pred_check
          %p293 = pneg %p211
        $region42: #{tpu_custom_call.1} parent=11 // pred_check_branch
          %295 = sbr.rel (%p293) target = $region44
        $region43: #{tpu_custom_call.1} parent=11 // pred_region
          _
        $region44: #{tpu_custom_call.1} parent=11 // pred_fallthru
          _
      $region12: #{tpu_custom_call.1} parent=5 // pred_fallthru
        _
      %p296 = scmp.lt.s32.totalorder %s17, 2
      // Predicated region
      $region45: #{tpu_custom_call.1} parent=5 // pred_check
        %p297 = pneg %p296
      $region46: #{tpu_custom_call.1} parent=5 // pred_check_branch
        %299 = sbr.rel (%p297) target = $region48
      $region47: #{tpu_custom_call.1} parent=5 // pred_region
        // Predicated region
        $region49: #{tpu_custom_call.1} parent=47 // pred_check
          %p300 = pneg %p37
        $region50: #{tpu_custom_call.1} parent=47 // pred_check_branch
          %302 = sbr.rel (%p300) target = $region52
        $region51: #{tpu_custom_call.1} parent=47 // pred_region
          %p303 = scmp.lt.s32.totalorder %s17, 1
          %s304 = scalar_select %p303, %s17, 1
          %s305 = smul.addr %s304, 4
          %s306 = scalar_lea.vmem %s0, %s305
        $region52: #{tpu_custom_call.1} parent=47 // pred_fallthru
          _
      $region48: #{tpu_custom_call.1} parent=5 // pred_fallthru
        _
      %p307 = scmp.le.s32.totalorder 1, %s17
      %p308 = scmp.lt.s32.totalorder %s17, 3
      %p309 = pnand %p307, %p308
      %p310 = pneg %p309
      // Predicated region
      $region53: #{tpu_custom_call.1} parent=5 // pred_check
        _
      $region54: #{tpu_custom_call.1} parent=5 // pred_check_branch
        %312 = sbr.rel (%p309) target = $region56
      $region55: #{tpu_custom_call.1} parent=5 // pred_region
        %s313 = ssub.s32 %s17, 1
        // Predicated region
        $region57: #{tpu_custom_call.1} parent=55 // pred_check
          %p314 = pneg %p64
        $region58: #{tpu_custom_call.1} parent=55 // pred_check_branch
          %316 = sbr.rel (%p314) target = $region60
        $region59: #{tpu_custom_call.1} parent=55 // pred_region
          %317 = dma.done [#allocation3], 320
        $region60: #{tpu_custom_call.1} parent=55 // pred_fallthru
          _
        // Predicated region
        $region61: #{tpu_custom_call.1} parent=55 // pred_check
          %p318 = pneg %p148
        $region62: #{tpu_custom_call.1} parent=55 // pred_check_branch
          %320 = sbr.rel (%p318) target = $region64
        $region63: #{tpu_custom_call.1} parent=55 // pred_region
          %321 = dma.done [#allocation5], 1024
        $region64: #{tpu_custom_call.1} parent=55 // pred_fallthru
          _
        %p322 = scmp.lt.s32.totalorder %s22, 1
        %s323 = scalar_select %p322, %s22, 1
        %s324 = smul.addr %s323, 4
        %s325 = scalar_lea.vmem %s0, %s324
        %p326 = pneg %p43
        %p327 = pneg %p40
        %p328 = pneg %p64
        %p329 = pneg %p61
        %p330 = pneg %p85
        %p331 = pneg %p82
        %p332 = pneg %p106
        %p333 = pneg %p103
        %p334 = pneg %p127
        %p335 = pneg %p124
        %p336 = pneg %p148
        %p337 = pneg %p145
        %p338 = pneg %p169
        %p339 = pneg %p166
        %p340 = pneg %p190
        %p341 = pneg %p187
        %p342 = pneg %p211
        %p343 = pneg %p208
        %p344 = pneg %p237
        %p345 = pneg %p234
        %p346 = scmp.lt.s32.totalorder %s22, 1
        %s347 = scalar_select %p346, %s22, 1
        %s348 = smul.addr %s347, 8
        %s349 = scalar_lea.vmem %s9, %s348
        %p350 = scmp.lt.s32.totalorder %s22, 1
        %s351 = scalar_select %p350, %s22, 1
        %s352 = smul.addr %s351, 4
        %s353 = scalar_lea.vmem %s0, %s352
        %p354 = scmp.lt.s32.totalorder %s22, 1
        %s355 = scalar_select %p354, %s22, 1
        %s356 = smul.addr %s355, 8
        %s357 = scalar_lea.vmem %s9, %s356
        %v359 = vld [vmem:[%s353] sm:$0xf]
        %v360 = vld [vmem:[#allocation2] sm:$0xf]
        %v361 = vld [vmem:[#allocation2 + $0x4] sm:$0xf]
        %v362 = vld [vmem:[#allocation2 + $0x8] sm:$0xf]
        %v363 = vld [vmem:[#allocation2 + $0xc] sm:$0xf]
        %v364 = vld [vmem:[#allocation2 + $0x10] sm:$0xf]
        %v365 = vld [vmem:[%s2] sm:$0x1]
        %v367 = vlaneseq
        %v368 = vshrl.u32 %v367, 7
        %v369 = vsub.s32 0, %v368
        %v370 = vrot.slane %v365, %v369
        %v377 = vunpack.c.l.b16 %v360
        %v378 = vunpack.c.l.b16 %v361
        %v379 = vunpack.c.l.b16 %v362
        %v380 = vunpack.c.l.b16 %v363
        %v381 = vunpack.c.l.b16 %v364
        %v382 = vpack.c.b16 %v378, %v377
        %v383 = vpack.c.b16 %v380, %v379
        %v384 = vpack.c.b16 %v381, %v381
        %vm387 = vcmask 326656
        %v389 = vsel %vm387, %v359, 0
        %vm391 = vcmask 1043456
        %v393 = vsel %vm391, %v384, 0
        %395 = vmatprep.subr.bf16.mxu0 0
        %396 = vmatpush1.bf16.msra.mxu0 %v382
        %397 = vmatprep.subr.bf16.mxu0 0
        %398 = vmatpush1.bf16.msra.mxu0 %v383
        %399 = vmatprep.subr.bf16.mxu0 0
        %400 = vmatpush1.bf16.msra.mxu0 %v393
        %401 = vmatprep.subr.bf16.mxu0 0
        %402 = vmatpush1.bf16.msra.mxu0 0
        %403 = vmatprep.subr.bf16.mxu0 0
        %404 = vmatpush1.bf16.msra.mxu0 0
        %405 = vmatprep.subr.bf16.mxu0 0
        %406 = vmatpush1.bf16.msra.mxu0 0
        %407 = vmatprep.subr.bf16.mxu0 0
        %408 = vmatpush1.bf16.msra.mxu0 0
        %409 = vmatprep.subr.bf16.mxu0 0
        %410 = vmatpush1.bf16.msra.mxu0 0
        %411 = vmatprep.subr.bf16.mxu0 0
        %412 = vmatpush1.bf16.msra.mxu0 0
        %413 = vmatprep.subr.bf16.mxu0 0
        %414 = vmatpush1.bf16.msra.mxu0 0
        %415 = vmatprep.subr.bf16.mxu0 0
        %416 = vmatpush1.bf16.msra.mxu0 0
        %417 = vmatprep.subr.bf16.mxu0 0
        %418 = vmatpush1.bf16.msra.mxu0 0
        %419 = vmatprep.subr.bf16.mxu0 0
        %420 = vmatpush1.bf16.msra.mxu0 0
        %421 = vmatprep.subr.bf16.mxu0 0
        %422 = vmatpush1.bf16.msra.mxu0 0
        %423 = vmatprep.subr.bf16.mxu0 0
        %424 = vmatpush1.bf16.msra.mxu0 0
        %425 = vmatprep.subr.bf16.mxu0 0
        %426 = vmatpush1.bf16.msra.mxu0 0
        %427 = vmatprep.mubr.bf16.mxu0 0
        %428 = vmatmul.mubr.bf16.gmra.mrb[0].mxu0 %v389
        %v429 = vpop.f32.mrb[0].mxu0
        %v430 = vadd.f32 %v370, %v429
        %v431 = vpop.f32.mrb[0].mxu0
        %v432 = vpop.f32.mrb[0].mxu0
        %v433 = vpop.f32.mrb[0].mxu0
        %434 = vdwg.mxu0
        %v435 = vmax.f32 %v430, 0.0
        %v436 = vld [vmem:[%s3] sm:$0xf]
        %v437 = vld [vmem:[%s3 + $0x4] sm:$0xf]
        %v438 = vld [vmem:[%s3 + $0x8] sm:$0xf]
        %v439 = vld [vmem:[%s3 + $0xc] sm:$0xf]
        %v440 = vld [vmem:[%s3 + $0x10] sm:$0xf]
        %v441 = vld [vmem:[%s3 + $0x14] sm:$0xf]
        %v442 = vld [vmem:[%s3 + $0x18] sm:$0xf]
        %v443 = vld [vmem:[%s3 + $0x1c] sm:$0xf]
        %v444 = vld [vmem:[%s3 + $0x20] sm:$0xf]
        %v445 = vld [vmem:[%s3 + $0x24] sm:$0xf]
        %v446 = vld [vmem:[%s3 + $0x28] sm:$0xf]
        %v447 = vld [vmem:[%s3 + $0x2c] sm:$0xf]
        %v448 = vld [vmem:[%s3 + $0x30] sm:$0xf]
        %v449 = vld [vmem:[%s3 + $0x34] sm:$0xf]
        %v450 = vld [vmem:[%s3 + $0x38] sm:$0xf]
        %v451 = vld [vmem:[%s3 + $0x3c] sm:$0xf]
        %v452 = vld [vmem:[%s4] sm:$0x1]
        %v453 = vpack.c.bf16 %v435, %v435
        %v455 = vlaneseq
        %v456 = vshrl.u32 %v455, 7
        %v457 = vsub.s32 0, %v456
        %v458 = vrot.slane %v452, %v457
        %v476 = vunpack.c.l.b16 %v436
        %v477 = vunpack.c.l.b16 %v437
        %v478 = vunpack.c.l.b16 %v438
        %v479 = vunpack.c.l.b16 %v439
        %v480 = vunpack.c.l.b16 %v440
        %v481 = vunpack.c.l.b16 %v441
        %v482 = vunpack.c.l.b16 %v442
        %v483 = vunpack.c.l.b16 %v443
        %v484 = vunpack.c.l.b16 %v444
        %v485 = vunpack.c.l.b16 %v445
        %v486 = vunpack.c.l.b16 %v446
        %v487 = vunpack.c.l.b16 %v447
        %v488 = vunpack.c.l.b16 %v448
        %v489 = vunpack.c.l.b16 %v449
        %v490 = vunpack.c.l.b16 %v450
        %v491 = vunpack.c.l.b16 %v451
        %v492 = vpack.c.b16 %v477, %v476
        %v493 = vpack.c.b16 %v479, %v478
        %v494 = vpack.c.b16 %v481, %v480
        %v495 = vpack.c.b16 %v483, %v482
        %v496 = vpack.c.b16 %v485, %v484
        %v497 = vpack.c.b16 %v487, %v486
        %v498 = vpack.c.b16 %v489, %v488
        %v499 = vpack.c.b16 %v491, %v490
        %508 = vmatprep.subr.bf16.mxu0 0
        %509 = vmatpush1.bf16.msra.mxu0 %v492
        %510 = vmatprep.subr.bf16.mxu0 0
        %511 = vmatpush1.bf16.msra.mxu0 %v493
        %512 = vmatprep.subr.bf16.mxu0 0
        %513 = vmatpush1.bf16.msra.mxu0 %v494
        %514 = vmatprep.subr.bf16.mxu0 0
        %515 = vmatpush1.bf16.msra.mxu0 %v495
        %516 = vmatprep.subr.bf16.mxu0 0
        %517 = vmatpush1.bf16.msra.mxu0 %v496
        %518 = vmatprep.subr.bf16.mxu0 0
        %519 = vmatpush1.bf16.msra.mxu0 %v497
        %520 = vmatprep.subr.bf16.mxu0 0
        %521 = vmatpush1.bf16.msra.mxu0 %v498
        %522 = vmatprep.subr.bf16.mxu0 0
        %523 = vmatpush1.bf16.msra.mxu0 %v499
        %524 = vmatprep.subr.bf16.mxu0 0
        %525 = vmatpush1.bf16.msra.mxu0 0
        %526 = vmatprep.subr.bf16.mxu0 0
        %527 = vmatpush1.bf16.msra.mxu0 0
        %528 = vmatprep.subr.bf16.mxu0 0
        %529 = vmatpush1.bf16.msra.mxu0 0
        %530 = vmatprep.subr.bf16.mxu0 0
        %531 = vmatpush1.bf16.msra.mxu0 0
        %532 = vmatprep.subr.bf16.mxu0 0
        %533 = vmatpush1.bf16.msra.mxu0 0
        %534 = vmatprep.subr.bf16.mxu0 0
        %535 = vmatpush1.bf16.msra.mxu0 0
        %536 = vmatprep.subr.bf16.mxu0 0
        %537 = vmatpush1.bf16.msra.mxu0 0
        %538 = vmatprep.subr.bf16.mxu0 0
        %539 = vmatpush1.bf16.msra.mxu0 0
        %540 = vmatprep.mubr.bf16.mxu0 0
        %541 = vmatmul.mubr.bf16.gmra.mrb[0].mxu0 %v453
        %v542 = vpop.f32.mrb[0].mxu0
        %v543 = vadd.f32 %v458, %v542
        %v544 = vpop.f32.mrb[0].mxu0
        %v545 = vpop.f32.mrb[0].mxu0
        %v546 = vpop.f32.mrb[0].mxu0
        %547 = vdwg.mxu0
        %v548 = vmax.f32 %v543, 0.0
        %v549 = vld [vmem:[#allocation4] sm:$0xf]
        %v550 = vld [vmem:[#allocation4 + $0x4] sm:$0xf]
        %v551 = vld [vmem:[#allocation4 + $0x8] sm:$0xf]
        %v552 = vld [vmem:[#allocation4 + $0xc] sm:$0xf]
        %v553 = vld [vmem:[#allocation4 + $0x10] sm:$0xf]
        %v554 = vld [vmem:[#allocation4 + $0x14] sm:$0xf]
        %v555 = vld [vmem:[#allocation4 + $0x18] sm:$0xf]
        %v556 = vld [vmem:[#allocation4 + $0x1c] sm:$0xf]
        %v557 = vld [vmem:[#allocation4 + $0x20] sm:$0xf]
        %v558 = vld [vmem:[#allocation4 + $0x24] sm:$0xf]
        %v559 = vld [vmem:[#allocation4 + $0x28] sm:$0xf]
        %v560 = vld [vmem:[#allocation4 + $0x2c] sm:$0xf]
        %v561 = vld [vmem:[#allocation4 + $0x30] sm:$0xf]
        %v562 = vld [vmem:[#allocation4 + $0x34] sm:$0xf]
        %v563 = vld [vmem:[#allocation4 + $0x38] sm:$0xf]
        %v564 = vld [vmem:[#allocation4 + $0x3c] sm:$0xf]
        %v565 = vld [vmem:[%s6] sm:$0x1]
        %v566 = vpack.c.bf16 %v548, %v548
        %v568 = vlaneseq
        %v569 = vshrl.u32 %v568, 7
        %v570 = vsub.s32 0, %v569
        %v571 = vrot.slane %v565, %v570
        %v589 = vunpack.c.l.b16 %v549
        %v590 = vunpack.c.l.b16 %v550
        %v591 = vunpack.c.l.b16 %v551
        %v592 = vunpack.c.l.b16 %v552
        %v593 = vunpack.c.l.b16 %v553
        %v594 = vunpack.c.l.b16 %v554
        %v595 = vunpack.c.l.b16 %v555
        %v596 = vunpack.c.l.b16 %v556
        %v597 = vunpack.c.l.b16 %v557
        %v598 = vunpack.c.l.b16 %v558
        %v599 = vunpack.c.l.b16 %v559
        %v600 = vunpack.c.l.b16 %v560
        %v601 = vunpack.c.l.b16 %v561
        %v602 = vunpack.c.l.b16 %v562
        %v603 = vunpack.c.l.b16 %v563
        %v604 = vunpack.c.l.b16 %v564
        %v605 = vpack.c.b16 %v590, %v589
        %v606 = vpack.c.b16 %v592, %v591
        %v607 = vpack.c.b16 %v594, %v593
        %v608 = vpack.c.b16 %v596, %v595
        %v609 = vpack.c.b16 %v598, %v597
        %v610 = vpack.c.b16 %v600, %v599
        %v611 = vpack.c.b16 %v602, %v601
        %v612 = vpack.c.b16 %v604, %v603
        %621 = vmatprep.subr.bf16.mxu0 0
        %622 = vmatpush1.bf16.msra.mxu0 %v605
        %623 = vmatprep.subr.bf16.mxu0 0
        %624 = vmatpush1.bf16.msra.mxu0 %v606
        %625 = vmatprep.subr.bf16.mxu0 0
        %626 = vmatpush1.bf16.msra.mxu0 %v607
        %627 = vmatprep.subr.bf16.mxu0 0
        %628 = vmatpush1.bf16.msra.mxu0 %v608
        %629 = vmatprep.subr.bf16.mxu0 0
        %630 = vmatpush1.bf16.msra.mxu0 %v609
        %631 = vmatprep.subr.bf16.mxu0 0
        %632 = vmatpush1.bf16.msra.mxu0 %v610
        %633 = vmatprep.subr.bf16.mxu0 0
        %634 = vmatpush1.bf16.msra.mxu0 %v611
        %635 = vmatprep.subr.bf16.mxu0 0
        %636 = vmatpush1.bf16.msra.mxu0 %v612
        %637 = vmatprep.subr.bf16.mxu0 0
        %638 = vmatpush1.bf16.msra.mxu0 0
        %639 = vmatprep.subr.bf16.mxu0 0
        %640 = vmatpush1.bf16.msra.mxu0 0
        %641 = vmatprep.subr.bf16.mxu0 0
        %642 = vmatpush1.bf16.msra.mxu0 0
        %643 = vmatprep.subr.bf16.mxu0 0
        %644 = vmatpush1.bf16.msra.mxu0 0
        %645 = vmatprep.subr.bf16.mxu0 0
        %646 = vmatpush1.bf16.msra.mxu0 0
        %647 = vmatprep.subr.bf16.mxu0 0
        %648 = vmatpush1.bf16.msra.mxu0 0
        %649 = vmatprep.subr.bf16.mxu0 0
        %650 = vmatpush1.bf16.msra.mxu0 0
        %651 = vmatprep.subr.bf16.mxu0 0
        %652 = vmatpush1.bf16.msra.mxu0 0
        %653 = vmatprep.mubr.bf16.mxu0 0
        %654 = vmatmul.mubr.bf16.gmra.mrb[0].mxu0 %v566
        %v655 = vpop.f32.mrb[0].mxu0
        %v656 = vadd.f32 %v571, %v655
        %v657 = vpop.f32.mrb[0].mxu0
        %v658 = vpop.f32.mrb[0].mxu0
        %v659 = vpop.f32.mrb[0].mxu0
        %660 = vdwg.mxu0
        %v661 = vmax.f32 %v656, 0.0
        %v662 = vld [vmem:[%s7] sm:$0xf]
        %v663 = vld [vmem:[%s7 + $0x4] sm:$0xf]
        %v664 = vld [vmem:[%s7 + $0x8] sm:$0xf]
        %v665 = vld [vmem:[%s7 + $0xc] sm:$0xf]
        %v666 = vld [vmem:[%s7 + $0x10] sm:$0xf]
        %v667 = vld [vmem:[%s7 + $0x14] sm:$0xf]
        %v668 = vld [vmem:[%s7 + $0x18] sm:$0xf]
        %v669 = vld [vmem:[%s7 + $0x1c] sm:$0xf]
        %v670 = vld [vmem:[%s7 + $0x20] sm:$0xf]
        %v671 = vld [vmem:[%s7 + $0x24] sm:$0xf]
        %v672 = vld [vmem:[%s7 + $0x28] sm:$0xf]
        %v673 = vld [vmem:[%s7 + $0x2c] sm:$0xf]
        %v674 = vld [vmem:[%s7 + $0x30] sm:$0xf]
        %v675 = vld [vmem:[%s7 + $0x34] sm:$0xf]
        %v676 = vld [vmem:[%s7 + $0x38] sm:$0xf]
        %v677 = vld [vmem:[%s7 + $0x3c] sm:$0xf]
        %v678 = vld [vmem:[%s8] sm:$0x1]
        %v679 = vpack.c.bf16 %v661, %v661
        %v681 = vlaneseq
        %v682 = vshrl.u32 %v681, 7
        %v683 = vsub.s32 0, %v682
        %v684 = vrot.slane %v678, %v683
        %v702 = vunpack.c.l.b16 %v662
        %v703 = vunpack.c.l.b16 %v663
        %v704 = vunpack.c.l.b16 %v664
        %v705 = vunpack.c.l.b16 %v665
        %v706 = vunpack.c.l.b16 %v666
        %v707 = vunpack.c.l.b16 %v667
        %v708 = vunpack.c.l.b16 %v668
        %v709 = vunpack.c.l.b16 %v669
        %v710 = vunpack.c.l.b16 %v670
        %v711 = vunpack.c.l.b16 %v671
        %v712 = vunpack.c.l.b16 %v672
        %v713 = vunpack.c.l.b16 %v673
        %v714 = vunpack.c.l.b16 %v674
        %v715 = vunpack.c.l.b16 %v675
        %v716 = vunpack.c.l.b16 %v676
        %v717 = vunpack.c.l.b16 %v677
        %v718 = vpack.c.b16 %v703, %v702
        %v719 = vpack.c.b16 %v705, %v704
        %v720 = vpack.c.b16 %v707, %v706
        %v721 = vpack.c.b16 %v709, %v708
        %v722 = vpack.c.b16 %v711, %v710
        %v723 = vpack.c.b16 %v713, %v712
        %v724 = vpack.c.b16 %v715, %v714
        %v725 = vpack.c.b16 %v717, %v716
        %734 = vmatprep.subr.bf16.mxu0 0
        %735 = vmatpush1.bf16.msra.mxu0 %v718
        %736 = vmatprep.subr.bf16.mxu0 0
        %737 = vmatpush1.bf16.msra.mxu0 %v719
        %738 = vmatprep.subr.bf16.mxu0 0
        %739 = vmatpush1.bf16.msra.mxu0 %v720
        %740 = vmatprep.subr.bf16.mxu0 0
        %741 = vmatpush1.bf16.msra.mxu0 %v721
        %742 = vmatprep.subr.bf16.mxu0 0
        %743 = vmatpush1.bf16.msra.mxu0 %v722
        %744 = vmatprep.subr.bf16.mxu0 0
        %745 = vmatpush1.bf16.msra.mxu0 %v723
        %746 = vmatprep.subr.bf16.mxu0 0
        %747 = vmatpush1.bf16.msra.mxu0 %v724
        %748 = vmatprep.subr.bf16.mxu0 0
        %749 = vmatpush1.bf16.msra.mxu0 %v725
        %750 = vmatprep.subr.bf16.mxu0 0
        %751 = vmatpush1.bf16.msra.mxu0 0
        %752 = vmatprep.subr.bf16.mxu0 0
        %753 = vmatpush1.bf16.msra.mxu0 0
        %754 = vmatprep.subr.bf16.mxu0 0
        %755 = vmatpush1.bf16.msra.mxu0 0
        %756 = vmatprep.subr.bf16.mxu0 0
        %757 = vmatpush1.bf16.msra.mxu0 0
        %758 = vmatprep.subr.bf16.mxu0 0
        %759 = vmatpush1.bf16.msra.mxu0 0
        %760 = vmatprep.subr.bf16.mxu0 0
        %761 = vmatpush1.bf16.msra.mxu0 0
        %762 = vmatprep.subr.bf16.mxu0 0
        %763 = vmatpush1.bf16.msra.mxu0 0
        %764 = vmatprep.subr.bf16.mxu0 0
        %765 = vmatpush1.bf16.msra.mxu0 0
        %766 = vmatprep.mubr.bf16.mxu0 0
        %767 = vmatmul.mubr.bf16.gmra.mrb[0].mxu0 %v679
        %v768 = vpop.f32.mrb[0].mxu0
        %v769 = vadd.f32 %v684, %v768
        %v770 = vpop.f32.mrb[0].mxu0
        %v771 = vpop.f32.mrb[0].mxu0
        %v772 = vpop.f32.mrb[0].mxu0
        %773 = vdwg.mxu0
        %vm774 = vcmask 64512
        %775 = vst.msk [vmem:[%s357] sm:$0xff] %vm774, %v769
        %p776 = scmp.lt.s32.totalorder %s22, 1
        %s777 = scalar_select %p776, %s22, 1
        %s778 = smul.addr %s777, 8
        %s779 = scalar_lea.vmem %s9, %s778
        // Predicated region
        $region65: #{tpu_custom_call.1} parent=55 // pred_check
          %p780 = pneg %p234
        $region66: #{tpu_custom_call.1} parent=55 // pred_check_branch
          %782 = sbr.rel (%p780) target = $region68
        $region67: #{tpu_custom_call.1} parent=55 // pred_region
          _
        $region68: #{tpu_custom_call.1} parent=55 // pred_fallthru
          _
      $region56: #{tpu_custom_call.1} parent=5 // pred_fallthru
        _
      %p783 = scmp.le.s32.totalorder 2, %s17
      // Predicated region
      $region69: #{tpu_custom_call.1} parent=5 // pred_check
        %p784 = pneg %p783
      $region70: #{tpu_custom_call.1} parent=5 // pred_check_branch
        %786 = sbr.rel (%p784) target = $region72
      $region71: #{tpu_custom_call.1} parent=5 // pred_region
        %s787 = ssub.s32 %s17, 2
        // Predicated region
        $region73: #{tpu_custom_call.1} parent=71 // pred_check
          %p788 = pneg %p240
        $region74: #{tpu_custom_call.1} parent=71 // pred_check_branch
          %790 = sbr.rel (%p788) target = $region76
        $region75: #{tpu_custom_call.1} parent=71 // pred_region
          %p791 = scmp.lt.s32.totalorder %s23, 1
          %s792 = scalar_select %p791, %s23, 1
          %s793 = smul.addr %s792, 8
          %s794 = scalar_lea.vmem %s9, %s793
        $region76: #{tpu_custom_call.1} parent=71 // pred_fallthru
          _
      $region72: #{tpu_custom_call.1} parent=5 // pred_fallthru
        _
    $region6: #{tpu_custom_call.1} parent=1 // loop_footer
      %s21 = sadd.s32 1, %s17
    $region7: #{tpu_custom_call.1} parent=1 // loop_footer_branch
      %16 = sbr.rel target = $region3
    $region8: #{tpu_custom_call.1} parent=1 // loop_exit
      _
    %795 = vsyncpa [#allocation3], 1
    %s796 = scalar_lea.sflag [#allocation3], 1
    %797 = vsyncpa %s796, 1
    %798 = vsyncpa [#allocation5], 1

</llo_original>
